<compile_context>
chip_gen: v7x
topology: tpu7x:2x2x1
jax: 0.10.0
libtpu: 0.0.40
codegen_flags: <defaults>
</compile_context>

<pallas_src>
import functools

import jax
import jax.numpy as jnp
from jax.experimental import pallas as pl
from jax.experimental.pallas import tpu as pltpu


def _round_up(n, m):
    return ((n + m - 1) // m) * m


def _attention_block_kernel(x_ref, w1_ref, b1_ref, w2_ref, b2_ref, out_ref,
                            acc_ref, *, inv_hw):
    s = pl.program_id(1)

    @pl.when(s == 0)
    def _init():
        acc_ref[...] = jnp.zeros_like(acc_ref)

    # Accumulate spatial sum in f32 without materializing an f32 copy of x.
    acc_ref[...] += jnp.sum(x_ref[...], axis=-1, dtype=jnp.float32)

    @pl.when(s == pl.num_programs(1) - 1)
    def _finalize():
        pooled = acc_ref[...] * inv_hw                                     # (tb, C_in)
        h = jnp.dot(pooled, w1_ref[...],
                    preferred_element_type=jnp.float32) + b1_ref[...]
        h = jnp.maximum(h, 0.0)
        # 1/temperature is already folded into w2/b2 in the wrapper.
        logits = jnp.dot(h, w2_ref[...],
                         preferred_element_type=jnp.float32) + b2_ref[...]
        m = jnp.max(logits, axis=-1, keepdims=True)
        e = jnp.exp(logits - m)
        out_ref[...] = (e / jnp.sum(e, axis=-1, keepdims=True)).astype(out_ref.dtype)


def attention_block(x, w1, b1, w2, b2, temperature, *, vmem_budget_bytes=8 << 20):
    """x: (B, C_in, H, W) NCHW; w1: (C_in, bottleneck); w2: (bottleneck, C_out).

    Linear weights are pre-transposed to (in, out) so the kernel computes
    y = x @ W + b (equivalent to PyTorch's x @ W.T + b).
    """
    B, C_in, H, W = x.shape
    HW = H * W
    bottleneck = w1.shape[1]
    C_out = w2.shape[1]
    itemsize = jnp.dtype(x.dtype).itemsize

    # Fold 1/temperature into the second linear layer (identical math in f32).
    inv_t = 1.0 / jnp.asarray(temperature, jnp.float32)
    w1f = w1.astype(jnp.float32)
    b1f = b1.astype(jnp.float32).reshape(1, bottleneck)
    w2s = w2.astype(jnp.float32) * inv_t
    b2s = (b2.astype(jnp.float32) * inv_t).reshape(1, C_out)

    # Lane-dense layout: flatten spatial dims so the last axis is H*W.
    xf = x.reshape(B, C_in, HW)

    # Batch tiling: single block if small, otherwise 8-row (sublane) blocks.
    if B <= 8:
        tb, B_pad = B, B
    else:
        tb = 8
        B_pad = _round_up(B, tb)
    nb = B_pad // tb

    # Spatial chunk: multiple of 128 lanes, sized so the double-buffered x
    # stream stays within a modest VMEM budget (fits v7x's 64 MiB VMEM too).
    per_lane_col = 2 * tb * C_in * itemsize  # double-buffered bytes per lane col
    ts_cap = max(128, (vmem_budget_bytes // max(per_lane_col, 1)) // 128 * 128)
    ts = min(ts_cap, _round_up(HW, 128), 2048)
    HW_pad = _round_up(HW, ts)
    ns = HW_pad // ts

    # Zero padding: padded spatial columns add 0 to the sum (mean divides by the
    # real HW); padded batch rows are sliced off at the end.
    if B_pad != B or HW_pad != HW:
        xf = jnp.pad(xf, ((0, B_pad - B), (0, 0), (0, HW_pad - HW)))

    kernel = functools.partial(_attention_block_kernel, inv_hw=1.0 / float(HW))

    cost = pl.CostEstimate(
        flops=int(2 * B * (C_in * bottleneck + bottleneck * C_out) + B * C_in * HW),
        transcendentals=int(B * C_out),
        bytes_accessed=int(
            B * C_in * HW * itemsize
            + (C_in * bottleneck + bottleneck * C_out + bottleneck + C_out) * 4
            + B * C_out * 4
        ),
    )

    out = pl.pallas_call(
        kernel,
        out_shape=jax.ShapeDtypeStruct((B_pad, C_out), jnp.float32),
        grid_spec=pltpu.PrefetchScalarGridSpec(
            num_scalar_prefetch=0,
            grid=(nb, ns),
            in_specs=[
                # x: streamed spatial chunks, auto double-buffered.
                pl.BlockSpec((tb, C_in, ts), lambda b, s: (b, 0, s)),
                # Weights/biases: constant index maps -> DMA'd once, resident.
                pl.BlockSpec((C_in, bottleneck), lambda b, s: (0, 0)),
                pl.BlockSpec((1, bottleneck), lambda b, s: (0, 0)),
                pl.BlockSpec((bottleneck, C_out), lambda b, s: (0, 0)),
                pl.BlockSpec((1, C_out), lambda b, s: (0, 0)),
            ],
            out_specs=pl.BlockSpec((tb, C_out), lambda b, s: (b, 0)),
            scratch_shapes=[pltpu.VMEM((tb, C_in), jnp.float32)],
        ),
        compiler_params=pltpu.CompilerParams(
            dimension_semantics=("parallel", "arbitrary"),
            vmem_limit_bytes=64 * 1024 * 1024,
        ),
        cost_estimate=cost,
    )(xf, w1f, b1f, w2s, b2s)

    return out[:B]


if __name__ == "__main__":
    # Module hyperparameters (small, consistent with the forward pass)
    batch = 2
    in_channels = 4
    H = W = 16
    bottleneck_units = 32
    out_channels = 8
    temperature = 2.0

    key = jax.random.PRNGKey(0)
    kx, k1, k2, k3, k4 = jax.random.split(key, 5)

    # Deterministic synthetic inputs / parameters
    x = jax.random.normal(kx, (batch, in_channels, H, W), dtype=jnp.float32)

    # PyTorch nn.Linear weights are (out_features, in_features); build them that
    # way, then transpose to (in, out) for the kernel.
    W1 = jax.random.normal(k1, (bottleneck_units, in_channels), dtype=jnp.float32) * 0.1
    b1 = jax.random.normal(k2, (bottleneck_units,), dtype=jnp.float32) * 0.1
    W2 = jax.random.normal(k3, (out_channels, bottleneck_units), dtype=jnp.float32) * 0.1
    b2 = jax.random.normal(k4, (out_channels,), dtype=jnp.float32) * 0.1

    out = attention_block(x, W1.T, b1, W2.T, b2, temperature)
    out = jax.block_until_ready(out)

    # Pure-JAX reference check (same math, outside Pallas)
    pooled = jnp.mean(x, axis=(2, 3))
    h = jnp.maximum(pooled @ W1.T + b1, 0.0)
    logits = h @ W2.T + b2
    ref = jax.nn.softmax(logits / temperature, axis=-1)
    assert jnp.allclose(out, ref, atol=1e-5, rtol=1e-5), "mismatch vs reference"

    print("KERNEL_OK")
</pallas_src>

<mosaic_0001>
module attributes {stable_mosaic.version = 11 : i64} {
  func.func @_attention_block_kernel(%arg0: i32, %arg1: i32, %arg2: memref<2x4x256xf32, #tpu.memory_space<vmem>>, %arg3: memref<4x32xf32, #tpu.memory_space<vmem>>, %arg4: memref<1x32xf32, #tpu.memory_space<vmem>>, %arg5: memref<32x8xf32, #tpu.memory_space<vmem>>, %arg6: memref<1x8xf32, #tpu.memory_space<vmem>>, %arg7: memref<2x8xf32, #tpu.memory_space<vmem>>, %arg8: memref<2x4xf32, #tpu.memory_space<vmem>>) attributes {dimension_semantics = [#tpu.dimension_semantics<parallel>, #tpu.dimension_semantics<arbitrary>], iteration_bounds = array<i64: 1, 1>, scalar_prefetch = 0 : i64, scratch_operands = 1 : i64, tpu.core_type = #tpu.core_type<tc>, window_params = [{transform_indices = @transform_0, window_bounds = array<i64: 2, 4, 256>}, {pipeline_mode = #tpu.pipeline_mode<synchronous>, transform_indices = @transform_1, window_bounds = array<i64: 4, 32>}, {pipeline_mode = #tpu.pipeline_mode<synchronous>, transform_indices = @transform_2, window_bounds = array<i64: 1, 32>}, {pipeline_mode = #tpu.pipeline_mode<synchronous>, transform_indices = @transform_3, window_bounds = array<i64: 32, 8>}, {pipeline_mode = #tpu.pipeline_mode<synchronous>, transform_indices = @transform_4, window_bounds = array<i64: 1, 8>}, {transform_indices = @transform_5, window_bounds = array<i64: 2, 8>}]} {
    %c0_i32 = arith.constant 0 : i32
    %0 = arith.cmpi eq, %arg1, %c0_i32 : i32
    %1 = arith.extui %0 : i1 to i32
    %c0_i32_0 = arith.constant 0 : i32
    %2 = arith.cmpi ne, %1, %c0_i32_0 : i32
    scf.if %2 {
      %cst_9 = arith.constant 0.000000e+00 : f32
      %11 = vector.broadcast %cst_9 : f32 to vector<2x4xf32>
      %c0_10 = arith.constant 0 : index
      %c0_11 = arith.constant 0 : index
      %12 = vector.load %arg8[%c0_10, %c0_11] : memref<2x4xf32, #tpu.memory_space<vmem>>, vector<2x4xf32>
      tpu.vector_store %arg8[%c0_10, %c0_11], %11 {strides = array<i32>} : memref<2x4xf32, #tpu.memory_space<vmem>>, vector<2x4xf32>,
    } else {
    }
    %c0 = arith.constant 0 : index
    %c0_1 = arith.constant 0 : index
    %3 = vector.load %arg8[%c0, %c0_1] : memref<2x4xf32, #tpu.memory_space<vmem>>, vector<2x4xf32>
    %c0_2 = arith.constant 0 : index
    %c0_3 = arith.constant 0 : index
    %c0_4 = arith.constant 0 : index
    %4 = vector.load %arg2[%c0_2, %c0_3, %c0_4] : memref<2x4x256xf32, #tpu.memory_space<vmem>>, vector<2x4x256xf32>
    %cst = arith.constant dense<0.000000e+00> : vector<2x4xf32>
    %5 = vector.multi_reduction <add>, %4, %cst [2] : vector<2x4x256xf32> to vector<2x4xf32>
    %6 = arith.addf %3, %5 : vector<2x4xf32>
    %c0_5 = arith.constant 0 : index
    %c0_6 = arith.constant 0 : index
    %7 = vector.load %arg8[%c0_5, %c0_6] : memref<2x4xf32, #tpu.memory_space<vmem>>, vector<2x4xf32>
    tpu.vector_store %arg8[%c0_5, %c0_6], %6 {strides = array<i32>} : memref<2x4xf32, #tpu.memory_space<vmem>>, vector<2x4xf32>,
    %c0_i32_7 = arith.constant 0 : i32
    %8 = arith.cmpi eq, %arg1, %c0_i32_7 : i32
    %9 = arith.extui %8 : i1 to i32
    %c0_i32_8 = arith.constant 0 : i32
    %10 = arith.cmpi ne, %9, %c0_i32_8 : i32
    scf.if %10 {
      %c0_9 = arith.constant 0 : index
      %c0_10 = arith.constant 0 : index
      %11 = vector.load %arg8[%c0_9, %c0_10] : memref<2x4xf32, #tpu.memory_space<vmem>>, vector<2x4xf32>
      %cst_11 = arith.constant 3.906250e-03 : f32
      %12 = vector.broadcast %cst_11 : f32 to vector<2x4xf32>
      %13 = arith.mulf %11, %12 : vector<2x4xf32>
      %c0_12 = arith.constant 0 : index
      %c0_13 = arith.constant 0 : index
      %14 = vector.load %arg3[%c0_12, %c0_13] : memref<4x32xf32, #tpu.memory_space<vmem>>, vector<4x32xf32>
      %cst_14 = arith.constant dense<0.000000e+00> : vector<2x32xf32>
      %15 = tpu.matmul %13, %14, %cst_14 {dimension_numbers = #tpu.dot_dimension_numbers<[1], [0], [0], [1], [0, 0, 1, 1], [], []>} : vector<2x4xf32>, vector<4x32xf32>, vector<2x32xf32> -> vector<2x32xf32>
      %c0_15 = arith.constant 0 : index
      %c0_16 = arith.constant 0 : index
      %16 = vector.load %arg4[%c0_15, %c0_16] : memref<1x32xf32, #tpu.memory_space<vmem>>, vector<1x32xf32>
      %17 = vector.broadcast %16 : vector<1x32xf32> to vector<2x32xf32>
      %18 = arith.addf %15, %17 : vector<2x32xf32>
      %cst_17 = arith.constant 0.000000e+00 : f32
      %19 = vector.broadcast %cst_17 : f32 to vector<2x32xf32>
      %20 = arith.maximumf %18, %19 : vector<2x32xf32>
      %c0_18 = arith.constant 0 : index
      %c0_19 = arith.constant 0 : index
      %21 = vector.load %arg5[%c0_18, %c0_19] : memref<32x8xf32, #tpu.memory_space<vmem>>, vector<32x8xf32>
      %cst_20 = arith.constant dense<0.000000e+00> : vector<2x8xf32>
      %22 = tpu.matmul %20, %21, %cst_20 {dimension_numbers = #tpu.dot_dimension_numbers<[1], [0], [0], [1], [0, 0, 1, 1], [], []>} : vector<2x32xf32>, vector<32x8xf32>, vector<2x8xf32> -> vector<2x8xf32>
      %c0_21 = arith.constant 0 : index
      %c0_22 = arith.constant 0 : index
      %23 = vector.load %arg6[%c0_21, %c0_22] : memref<1x8xf32, #tpu.memory_space<vmem>>, vector<1x8xf32>
      %24 = vector.broadcast %23 : vector<1x8xf32> to vector<2x8xf32>
      %25 = arith.addf %22, %24 : vector<2x8xf32>
      %cst_23 = arith.constant dense<0xFF800000> : vector<2xf32>
      %26 = vector.multi_reduction <maximumf>, %25, %cst_23 [1] : vector<2x8xf32> to vector<2xf32>
      %27 = vector.shape_cast %26 : vector<2xf32> to vector<2x1xf32>
      %28 = vector.broadcast %27 : vector<2x1xf32> to vector<2x8xf32>
      %29 = arith.subf %25, %28 : vector<2x8xf32>
      %30 = math.exp %29 : vector<2x8xf32>
      %cst_24 = arith.constant dense<0.000000e+00> : vector<2xf32>
      %31 = vector.multi_reduction <add>, %30, %cst_24 [1] : vector<2x8xf32> to vector<2xf32>
      %32 = vector.shape_cast %31 : vector<2xf32> to vector<2x1xf32>
      %33 = vector.broadcast %32 : vector<2x1xf32> to vector<2x8xf32>
      %34 = arith.divf %30, %33 : vector<2x8xf32>
      %c0_25 = arith.constant 0 : index
      %c0_26 = arith.constant 0 : index
      %35 = vector.load %arg7[%c0_25, %c0_26] : memref<2x8xf32, #tpu.memory_space<vmem>>, vector<2x8xf32>
      tpu.vector_store %arg7[%c0_25, %c0_26], %34 {strides = array<i32>} : memref<2x8xf32, #tpu.memory_space<vmem>>, vector<2x8xf32>,
    } else {
    }
    return
  }
  func.func @transform_0(%arg0: i32, %arg1: i32) -> (i32, i32, i32) {
    %c0_i32 = arith.constant 0 : i32
    %c0_i32_0 = arith.constant 0 : i32
    return %arg0, %c0_i32, %arg1 : i32, i32, i32
  }
  func.func @transform_1(%arg0: i32, %arg1: i32) -> (i32, i32) {
    %c0_i32 = arith.constant 0 : i32
    %c0_i32_0 = arith.constant 0 : i32
    %c0_i32_1 = arith.constant 0 : i32
    return %c0_i32, %c0_i32_0 : i32, i32
  }
  func.func @transform_2(%arg0: i32, %arg1: i32) -> (i32, i32) {
    %c0_i32 = arith.constant 0 : i32
    %c0_i32_0 = arith.constant 0 : i32
    %c0_i32_1 = arith.constant 0 : i32
    return %c0_i32, %c0_i32_0 : i32, i32
  }
  func.func @transform_3(%arg0: i32, %arg1: i32) -> (i32, i32) {
    %c0_i32 = arith.constant 0 : i32
    %c0_i32_0 = arith.constant 0 : i32
    %c0_i32_1 = arith.constant 0 : i32
    return %c0_i32, %c0_i32_0 : i32, i32
  }
  func.func @transform_4(%arg0: i32, %arg1: i32) -> (i32, i32) {
    %c0_i32 = arith.constant 0 : i32
    %c0_i32_0 = arith.constant 0 : i32
    %c0_i32_1 = arith.constant 0 : i32
    return %c0_i32, %c0_i32_0 : i32, i32
  }
  func.func @transform_5(%arg0: i32, %arg1: i32) -> (i32, i32) {
    %c0_i32 = arith.constant 0 : i32
    %c0_i32_0 = arith.constant 0 : i32
    return %arg0, %c0_i32 : i32, i32
  }
}

</mosaic_0001>

<llo_original>
// kernel: tpu_custom_call.1
$region0: #{tpu_custom_call.1}
  #allocation0 [shape = 'u32[]', space=smem, size = 0x4, offset = 0x4, fixed_abs, tag = 'smem constant byte address 0x4 - core index']
  #allocation1 [shape = 'u32[144,128]{1,0:T(1,128)}', space=vmem, size = 0x12000, scoped, tag = 'internal scratch']
  #allocation2 [shape = 'f32[2,4]{1,0:T(2,128)}', space=vmem, size = 0x400, scoped, tag = 'scratch operand']
  %s0 = inlined_call_operand.hbm [shape: f32[2,4,256], index: 0, kind: input, shape index: {}]
  %s1 = inlined_call_operand.hbm [shape: f32[4,32], index: 1, kind: input, shape index: {}]
  %s2 = inlined_call_operand.hbm [shape: f32[1,32], index: 2, kind: input, shape index: {}]
  %s3 = inlined_call_operand.hbm [shape: f32[32,8], index: 3, kind: input, shape index: {}]
  %s4 = inlined_call_operand.hbm [shape: f32[1,8], index: 4, kind: input, shape index: {}]
  %s5 = inlined_call_operand.hbm [shape: f32[2,8], index: 5, kind: output, shape index: {}]
  %s6 = sld [smem:[#allocation0]]
  $region58: #{tpu_custom_call.1} parent=0
    _
  %s8 = ssub.s32 1, %s6
  %s9 = scalar_select 0, %s8, %s6
  $region1: #{tpu_custom_call.1} parent=0
    #allocation3 [shape = 'u8[8192]{0}', space=vmem, size = 0x2000, scoped, tag = 'input window, operand 0, single buffered']
    #allocation4 [shape = 's32[1]{0}', space=sflag, size = 0x4, scoped, tag = 'scoped memory for tpu_custom_call.1']
    #allocation5 [shape = 's32[1]{0}', space=sflag, size = 0x4, scoped, tag = 'scoped memory for tpu_custom_call.1']
    #allocation6 [shape = 'u8[2048]{0}', space=vmem, size = 0x800, scoped, tag = 'input window, operand 1, single buffered']
    #allocation7 [shape = 's32[1]{0}', space=sflag, size = 0x4, scoped, tag = 'scoped memory for tpu_custom_call.1']
    #allocation8 [shape = 'u8[512]{0}', space=vmem, size = 0x400, scoped, tag = 'input window, operand 2, single buffered']
    #allocation9 [shape = 'u8[16384]{0}', space=vmem, size = 0x4000, scoped, tag = 'input window, operand 3, single buffered']
    #allocation10 [shape = 's32[1]{0}', space=sflag, size = 0x4, scoped, tag = 'scoped memory for tpu_custom_call.1']
    #allocation11 [shape = 'u8[512]{0}', space=vmem, size = 0x400, scoped, tag = 'input window, operand 4, single buffered']
    #allocation12 [shape = 'u8[1024]{0}', space=vmem, size = 0x400, scoped, tag = 'output window, operand 0, single buffered']
    %10 = vsyncpa [#allocation4], 0
    %11 = vsyncpa [#allocation7], 0
    %12 = vsyncpa [#allocation10], 0
    %13 = vsyncpa [#allocation5], 0
    // Predicated region
    $region2: #{tpu_custom_call.1} parent=1 // pred_check
      _
    $region3: #{tpu_custom_call.1} parent=1 // pred_check_branch
      %15 = sbr.rel (0) target = $region5
    $region4: #{tpu_custom_call.1} parent=1 // pred_region
      %s17 = ssub.s32 256, 256
      %18 = vsyncadd [#allocation4], %s17
      %s19 = sshll.u32 [#allocation3], 4
      %s20 = int_to_ptr.vmem [resolvable:$true] %s19
      %25 = dma.hbm_to_vmem [thread:$0]  %s0, 256, %s20, [#allocation4], 128, 128, 8
    $region5: #{tpu_custom_call.1} parent=1 // pred_fallthru
      _
    // Predicated region
    $region6: #{tpu_custom_call.1} parent=1 // pred_check
      _
    $region7: #{tpu_custom_call.1} parent=1 // pred_check_branch
      %27 = sbr.rel (0) target = $region9
    $region8: #{tpu_custom_call.1} parent=1 // pred_region
      %s29 = ssub.s32 64, 64
      %30 = vsyncadd [#allocation7], %s29
      %s32 = sshll.u32 [#allocation6], 4
      %s33 = int_to_ptr.vmem [resolvable:$true] %s32
      %35 = dma.hbm_to_vmem [thread:$0]  %s1, 64, %s33, [#allocation7]
    $region9: #{tpu_custom_call.1} parent=1 // pred_fallthru
      _
    // Predicated region
    $region10: #{tpu_custom_call.1} parent=1 // pred_check
      _
    $region11: #{tpu_custom_call.1} parent=1 // pred_check_branch
      %37 = sbr.rel (0) target = $region13
    $region12: #{tpu_custom_call.1} parent=1 // pred_region
      %s39 = ssub.s32 16, 16
      %40 = vsyncadd [#allocation7], %s39
      %s42 = sshll.u32 [#allocation8], 4
      %s43 = int_to_ptr.vmem [resolvable:$true] %s42
      %45 = dma.hbm_to_vmem [thread:$0]  %s2, 16, %s43, [#allocation7]
    $region13: #{tpu_custom_call.1} parent=1 // pred_fallthru
      _
    // Predicated region
    $region14: #{tpu_custom_call.1} parent=1 // pred_check
      _
    $region15: #{tpu_custom_call.1} parent=1 // pred_check_branch
      %47 = sbr.rel (0) target = $region17
    $region16: #{tpu_custom_call.1} parent=1 // pred_region
      %s49 = ssub.s32 512, 512
      %50 = vsyncadd [#allocation10], %s49
      %s51 = sshll.u32 [#allocation9], 4
      %s52 = int_to_ptr.vmem [resolvable:$true] %s51
      %57 = dma.hbm_to_vmem [thread:$0]  %s3, 512, %s52, [#allocation10], 128, 128, 8
    $region17: #{tpu_custom_call.1} parent=1 // pred_fallthru
      _
    // Predicated region
    $region18: #{tpu_custom_call.1} parent=1 // pred_check
      _
    $region19: #{tpu_custom_call.1} parent=1 // pred_check_branch
      %59 = sbr.rel (0) target = $region21
    $region20: #{tpu_custom_call.1} parent=1 // pred_region
      %s61 = ssub.s32 16, 16
      %62 = vsyncadd [#allocation10], %s61
      %s64 = sshll.u32 [#allocation11], 4
      %s65 = int_to_ptr.vmem [resolvable:$true] %s64
      %67 = dma.hbm_to_vmem [thread:$0]  %s4, 16, %s65, [#allocation10]
    $region21: #{tpu_custom_call.1} parent=1 // pred_fallthru
      _
    // Predicated region
    $region22: #{tpu_custom_call.1} parent=1 // pred_check
      _
    $region23: #{tpu_custom_call.1} parent=1 // pred_check_branch
      %69 = sbr.rel (0) target = $region25
    $region24: #{tpu_custom_call.1} parent=1 // pred_region
      %70 = dma.done [#allocation4], 256
    $region25: #{tpu_custom_call.1} parent=1 // pred_fallthru
      _
    // Predicated region
    $region26: #{tpu_custom_call.1} parent=1 // pred_check
      _
    $region27: #{tpu_custom_call.1} parent=1 // pred_check_branch
      %72 = sbr.rel (0) target = $region29
    $region28: #{tpu_custom_call.1} parent=1 // pred_region
      %73 = dma.done [#allocation7], 64
    $region29: #{tpu_custom_call.1} parent=1 // pred_fallthru
      _
    // Predicated region
    $region30: #{tpu_custom_call.1} parent=1 // pred_check
      _
    $region31: #{tpu_custom_call.1} parent=1 // pred_check_branch
      %75 = sbr.rel (0) target = $region33
    $region32: #{tpu_custom_call.1} parent=1 // pred_region
      %76 = dma.done [#allocation7], 16
    $region33: #{tpu_custom_call.1} parent=1 // pred_fallthru
      _
    // Predicated region
    $region34: #{tpu_custom_call.1} parent=1 // pred_check
      _
    $region35: #{tpu_custom_call.1} parent=1 // pred_check_branch
      %78 = sbr.rel (0) target = $region37
    $region36: #{tpu_custom_call.1} parent=1 // pred_region
      %79 = dma.done [#allocation10], 512
    $region37: #{tpu_custom_call.1} parent=1 // pred_fallthru
      _
    // Predicated region
    $region38: #{tpu_custom_call.1} parent=1 // pred_check
      _
    $region39: #{tpu_custom_call.1} parent=1 // pred_check_branch
      %81 = sbr.rel (0) target = $region41
    $region40: #{tpu_custom_call.1} parent=1 // pred_region
      %82 = dma.done [#allocation10], 16
    $region41: #{tpu_custom_call.1} parent=1 // pred_fallthru
      _
    %p83 = scmp.eq.s32.totalorder 0, 0
    // Predicated region
    $region42: #{tpu_custom_call.1} parent=1 // pred_check
      %p84 = pneg %p83
    $region43: #{tpu_custom_call.1} parent=1 // pred_check_branch
      %86 = sbr.rel (%p84) target = $region45
    $region44: #{tpu_custom_call.1} parent=1 // pred_region
      %vm87 = vcmask 25600
      %88 = vst.msk [vmem:[#allocation2] sm:$0x3] %vm87, 0.0
    $region45: #{tpu_custom_call.1} parent=1 // pred_fallthru
      _
    %v89 = vld [vmem:[#allocation2] sm:$0x3]
    %v90 = vld [vmem:[#allocation3] sm:$0xff]
    %v91 = vld [vmem:[#allocation3 + $0x8] sm:$0xff]
    %v94 = vcombine.high %v90, %v90
    %v95 = vcombine.high %v91, %v91
    %vm98 = vcmask 1043456
    %v99 = vsel %vm98, %v90, 0.0
    %v100 = vsel %vm98, %v94, 0.0
    %v101 = vadd.f32 %v99, %v100
    %102 = vadd.xlane.f32.xlu0 %v101
    %v103 = vpop.xlane.xlu0 %102
    %v104 = vsel %vm98, %v91, 0.0
    %v105 = vsel %vm98, %v95, 0.0
    %v106 = vadd.f32 %v104, %v105
    %107 = vadd.xlane.f32.xlu0 %v106
    %v108 = vpop.xlane.xlu0 %107
    %v111 = vlaneseq
    %v112 = vand.u32 %v111, 127
    %v113 = vlaneseq
    %v114 = vshrl.u32 %v113, 7
    %v115 = vsub.s32 %v112, %v114
    %v116 = vrot.slane %v103, %v115
    %v117 = vlaneseq
    %v118 = vshrl.u32 %v117, 7
    %v119 = vsub.s32 %v112, %v118
    %v120 = vrot.slane %v108, %v119
    %vm121 = vcmask 1041409
    %v122 = vsel %vm121, %v120, %v116
    %v124 = vadd.f32 %v89, %v122
    %vm125 = vcmask 25600
    %126 = vst.msk [vmem:[#allocation2] sm:$0x3] %vm125, %v124
    // Predicated region
    $region46: #{tpu_custom_call.1} parent=1 // pred_check
      %p127 = pneg %p83
    $region47: #{tpu_custom_call.1} parent=1 // pred_check_branch
      %129 = sbr.rel (%p127) target = $region49
    $region48: #{tpu_custom_call.1} parent=1 // pred_region
      %v130 = vld [vmem:[#allocation2] sm:$0x3]
      %v131 = vmul.f32 %v130, 0.00390625
      %v132 = vld [vmem:[#allocation6] sm:$0xf]
      %v133 = vld [vmem:[#allocation8] sm:$0x1]
      %v135 = vlaneseq
      %v136 = vshrl.u32 %v135, 7
      %v137 = vsub.s32 0, %v136
      %v138 = vrot.slane %v133, %v137
      %vm140 = vcmask 31744
      %v142 = vsel %vm140, %v131, 0
      %v145 = vsel %vm98, %v132, 0
      %147 = vmatprep.subr.mxu0 0.0
      %148 = vmatpush1.msra.mxu0 %v145
      %149 = vmatprep.subr.mxu0 0.0
      %150 = vmatpush1.msra.mxu0 0.0
      %151 = vmatprep.subr.mxu0 0.0
      %152 = vmatpush1.msra.mxu0 0.0
      %153 = vmatprep.subr.mxu0 0.0
      %154 = vmatpush1.msra.mxu0 0.0
      %155 = vmatprep.subr.mxu0 0.0
      %156 = vmatpush1.msra.mxu0 0.0
      %157 = vmatprep.subr.mxu0 0.0
      %158 = vmatpush1.msra.mxu0 0.0
      %159 = vmatprep.subr.mxu0 0.0
      %160 = vmatpush1.msra.mxu0 0.0
      %161 = vmatprep.subr.mxu0 0.0
      %162 = vmatpush1.msra.mxu0 0.0
      %163 = vmatprep.subr.mxu0 0.0
      %164 = vmatpush1.msra.mxu0 0.0
      %165 = vmatprep.subr.mxu0 0.0
      %166 = vmatpush1.msra.mxu0 0.0
      %167 = vmatprep.subr.mxu0 0.0
      %168 = vmatpush1.msra.mxu0 0.0
      %169 = vmatprep.subr.mxu0 0.0
      %170 = vmatpush1.msra.mxu0 0.0
      %171 = vmatprep.subr.mxu0 0.0
      %172 = vmatpush1.msra.mxu0 0.0
      %173 = vmatprep.subr.mxu0 0.0
      %174 = vmatpush1.msra.mxu0 0.0
      %175 = vmatprep.subr.mxu0 0.0
      %176 = vmatpush1.msra.mxu0 0.0
      %177 = vmatprep.subr.mxu0 0.0
      %178 = vmatpush1.msra.mxu0 0.0
      %179 = vmatprep.subr.mxu0 0.0
      %180 = vmatpush1.msra.mxu0 0.0
      %181 = vmatprep.subr.mxu0 0.0
      %182 = vmatpush1.msra.mxu0 0.0
      %183 = vmatprep.subr.mxu0 0.0
      %184 = vmatpush1.msra.mxu0 0.0
      %185 = vmatprep.subr.mxu0 0.0
      %186 = vmatpush1.msra.mxu0 0.0
      %187 = vmatprep.subr.mxu0 0.0
      %188 = vmatpush1.msra.mxu0 0.0
      %189 = vmatprep.subr.mxu0 0.0
      %190 = vmatpush1.msra.mxu0 0.0
      %191 = vmatprep.subr.mxu0 0.0
      %192 = vmatpush1.msra.mxu0 0.0
      %193 = vmatprep.subr.mxu0 0.0
      %194 = vmatpush1.msra.mxu0 0.0
      %195 = vmatprep.subr.mxu0 0.0
      %196 = vmatpush1.msra.mxu0 0.0
      %197 = vmatprep.subr.mxu0 0.0
      %198 = vmatpush1.msra.mxu0 0.0
      %199 = vmatprep.subr.mxu0 0.0
      %200 = vmatpush1.msra.mxu0 0.0
      %201 = vmatprep.subr.mxu0 0.0
      %202 = vmatpush1.msra.mxu0 0.0
      %203 = vmatprep.subr.mxu0 0.0
      %204 = vmatpush1.msra.mxu0 0.0
      %205 = vmatprep.subr.mxu0 0.0
      %206 = vmatpush1.msra.mxu0 0.0
      %207 = vmatprep.subr.mxu0 0.0
      %208 = vmatpush1.msra.mxu0 0.0
      %209 = vmatprep.subr.mxu0 0.0
      %210 = vmatpush1.msra.mxu0 0.0
      %211 = vmatprep.mubr.f32.mxu0 0.0
      %212 = vmatmul.mubr.f32.gmra.mrb[0].mxu0 %v142
      %v213 = vpop.f32.mrb[0].mxu0
      %v214 = vadd.f32 %v138, %v213
      %v215 = vpop.f32.mrb[0].mxu0
      %216 = vdwg.mxu0
      %v217 = vmax.f32 %v214, 0.0
      %v218 = vld [vmem:[#allocation9] sm:$0xff]
      %v219 = vld [vmem:[#allocation9 + $0x8] sm:$0xff]
      %v220 = vld [vmem:[#allocation9 + $0x10] sm:$0xff]
      %v221 = vld [vmem:[#allocation9 + $0x18] sm:$0xff]
      %v222 = vld [vmem:[#allocation11] sm:$0x1]
      %v224 = vlaneseq
      %v225 = vshrl.u32 %v224, 7
      %v226 = vsub.s32 0, %v225
      %v227 = vrot.slane %v222, %v226
      %vm229 = vcmask 261120
      %v231 = vsel %vm229, %v217, 0
      %233 = vmatprep.subr.mxu0 0.0
      %234 = vmatpush1.msra.mxu0 %v218
      %235 = vmatprep.subr.mxu0 0.0
      %236 = vmatpush1.msra.mxu0 %v219
      %237 = vmatprep.subr.mxu0 0.0
      %238 = vmatpush1.msra.mxu0 %v220
      %239 = vmatprep.subr.mxu0 0.0
      %240 = vmatpush1.msra.mxu0 %v221
      %241 = vmatprep.subr.mxu0 0.0
      %242 = vmatpush1.msra.mxu0 0.0
      %243 = vmatprep.subr.mxu0 0.0
      %244 = vmatpush1.msra.mxu0 0.0
      %245 = vmatprep.subr.mxu0 0.0
      %246 = vmatpush1.msra.mxu0 0.0
      %247 = vmatprep.subr.mxu0 0.0
      %248 = vmatpush1.msra.mxu0 0.0
      %249 = vmatprep.subr.mxu0 0.0
      %250 = vmatpush1.msra.mxu0 0.0
      %251 = vmatprep.subr.mxu0 0.0
      %252 = vmatpush1.msra.mxu0 0.0
      %253 = vmatprep.subr.mxu0 0.0
      %254 = vmatpush1.msra.mxu0 0.0
      %255 = vmatprep.subr.mxu0 0.0
      %256 = vmatpush1.msra.mxu0 0.0
      %257 = vmatprep.subr.mxu0 0.0
      %258 = vmatpush1.msra.mxu0 0.0
      %259 = vmatprep.subr.mxu0 0.0
      %260 = vmatpush1.msra.mxu0 0.0
      %261 = vmatprep.subr.mxu0 0.0
      %262 = vmatpush1.msra.mxu0 0.0
      %263 = vmatprep.subr.mxu0 0.0
      %264 = vmatpush1.msra.mxu0 0.0
      %265 = vmatprep.subr.mxu0 0.0
      %266 = vmatpush1.msra.mxu0 0.0
      %267 = vmatprep.subr.mxu0 0.0
      %268 = vmatpush1.msra.mxu0 0.0
      %269 = vmatprep.subr.mxu0 0.0
      %270 = vmatpush1.msra.mxu0 0.0
      %271 = vmatprep.subr.mxu0 0.0
      %272 = vmatpush1.msra.mxu0 0.0
      %273 = vmatprep.subr.mxu0 0.0
      %274 = vmatpush1.msra.mxu0 0.0
      %275 = vmatprep.subr.mxu0 0.0
      %276 = vmatpush1.msra.mxu0 0.0
      %277 = vmatprep.subr.mxu0 0.0
      %278 = vmatpush1.msra.mxu0 0.0
      %279 = vmatprep.subr.mxu0 0.0
      %280 = vmatpush1.msra.mxu0 0.0
      %281 = vmatprep.subr.mxu0 0.0
      %282 = vmatpush1.msra.mxu0 0.0
      %283 = vmatprep.subr.mxu0 0.0
      %284 = vmatpush1.msra.mxu0 0.0
      %285 = vmatprep.subr.mxu0 0.0
      %286 = vmatpush1.msra.mxu0 0.0
      %287 = vmatprep.subr.mxu0 0.0
      %288 = vmatpush1.msra.mxu0 0.0
      %289 = vmatprep.subr.mxu0 0.0
      %290 = vmatpush1.msra.mxu0 0.0
      %291 = vmatprep.subr.mxu0 0.0
      %292 = vmatpush1.msra.mxu0 0.0
      %293 = vmatprep.subr.mxu0 0.0
      %294 = vmatpush1.msra.mxu0 0.0
      %295 = vmatprep.subr.mxu0 0.0
      %296 = vmatpush1.msra.mxu0 0.0
      %297 = vmatprep.mubr.f32.mxu0 0.0
      %298 = vmatmul.mubr.f32.gmra.mrb[0].mxu0 %v231
      %v299 = vpop.f32.mrb[0].mxu0
      %v300 = vadd.f32 %v227, %v299
      %v301 = vpop.f32.mrb[0].mxu0
      %302 = vdwg.mxu0
      %vm303 = vcmask 58368
      %v304 = vsel %vm303, %v300, -inf
      %305 = vmax.xlane.f32.xlu0 %v304
      %v306 = vpop.xlane.xlu0 %305
      %v307 = vsub.f32 %v300, %v306
      %v308 = vmul.f32 %v307, 1.442695
      %v309 = vpow.pop %v308
      %v310 = vsel %vm303, %v309, 0.0
      %311 = vadd.xlane.f32.xlu0 %v310
      %v312 = vpop.xlane.xlu0 %311
      %v313 = vrcp.pop %v312
      %v314 = vmul.f32 %v309, %v313
      %315 = vst.msk [vmem:[#allocation12] sm:$0x3] %vm303, %v314
    $region49: #{tpu_custom_call.1} parent=1 // pred_fallthru
      _
    // Predicated region
    $region50: #{tpu_custom_call.1} parent=1 // pred_check
      _
    $region51: #{tpu_custom_call.1} parent=1 // pred_check_branch
      %317 = sbr.rel (0) target = $region53
    $region52: #{tpu_custom_call.1} parent=1 // pred_region
      %s319 = ssub.s32 32, 32
      %320 = vsyncadd [#allocation5], %s319
      %s322 = sshll.u32 [#allocation12], 4
      %s323 = int_to_ptr.vmem [resolvable:$true] %s322
      %325 = dma.vmem_to_hbm [thread:$0]  %s323, 32, %s5, [#allocation5]
    $region53: #{tpu_custom_call.1} parent=1 // pred_fallthru
      _
    // Predicated region
    $region54: #{tpu_custom_call.1} parent=1 // pred_check
      _
    $region55: #{tpu_custom_call.1} parent=1 // pred_check_branch
      %327 = sbr.rel (0) target = $region57
    $region56: #{tpu_custom_call.1} parent=1 // pred_region
      %328 = dma.done [#allocation5], 32
    $region57: #{tpu_custom_call.1} parent=1 // pred_fallthru
      _
    %329 = vsyncpa [#allocation4], 1
    %330 = vsyncpa [#allocation7], 1
    %331 = vsyncpa [#allocation10], 1
    %332 = vsyncpa [#allocation5], 1

</llo_original>
